<compile_context>
chip_gen: v7x
topology: tpu7x:2x2x1
jax: 0.10.0
libtpu: 0.0.40
codegen_flags: <defaults>
</compile_context>

<pallas_src>
import functools

import jax
import jax.numpy as jnp
from jax.experimental import pallas as pl
from jax.experimental.pallas import tpu as pltpu

# Epsilon used by the Dice batch-norm.
# TODO(synk): confirm against the reference Dice (DeepCTR-style Dice uses
# 1e-8; a stock nn.BatchNorm1d default would be 1e-5).
DICE_EPS = 1e-8

MAX_TILE_T = 512   # time-tile cap; blocks beyond this are pipelined over NT


def _round_up(x: int, m: int) -> int:
    return (x + m - 1) // m * m


def _hidden_t(kT_ref, wbT_ref, biasT_ref):
    """h^T = W_b^T (H,D) @ k^T (D,TT) + bias (H,1)  ->  (H, TT) float32."""
    return jnp.dot(wbT_ref[0], kT_ref[0],
                   preferred_element_type=jnp.float32) + biasT_ref[0]


def _stats_kernel(kT_ref, wbT_ref, biasT_ref, sum_ref, sq_ref,
                  *, seq_len, needs_mask):
    """Pass 1: per-batch partial sum / sum-of-squares of h over the time axis.

    Output blocks are indexed by batch only, so the batch grid axis is
    'parallel'; accumulation happens over the (inner, 'arbitrary') time axis.
    """
    t = pl.program_id(1)
    hT = _hidden_t(kT_ref, wbT_ref, biasT_ref)            # (H, TT)

    if needs_mask:
        tt = hT.shape[1]
        col = jax.lax.broadcasted_iota(jnp.int32, (1, tt), 1)
        valid = ((t * tt + col) < seq_len).astype(jnp.float32)
        hv = hT * valid                                    # zero padded cols
    else:
        hv = hT

    @pl.when(t == 0)
    def _():
        sum_ref[...] = jnp.zeros_like(sum_ref)
        sq_ref[...] = jnp.zeros_like(sq_ref)

    sum_ref[0] += jnp.sum(hv, axis=1, keepdims=True)       # (H, 1)
    sq_ref[0] += jnp.sum(hv * hT, axis=1, keepdims=True)   # (H, 1)


def _apply_kernel(kT_ref, wbT_ref, biasT_ref, c_ref, w2t_ref, b2_ref, o_ref):
    """Pass 2: recompute h^T, Dice-gate with the batch statistics, project
    H -> 1 and store a lane-dense (1, TT) row of attention scores."""
    hT = _hidden_t(kT_ref, wbT_ref, biasT_ref)             # (H, TT)

    c = c_ref[...]                                         # (H, 4)
    mean, istd = c[:, 0:1], c[:, 1:2]
    alpha, om_alpha = c[:, 2:3], c[:, 3:4]                 # alpha, 1 - alpha

    p = jax.nn.sigmoid((hT - mean) * istd)
    h_act = hT * (alpha + p * om_alpha)                    # == p*h + a*(1-p)*h

    scores = jnp.dot(w2t_ref[...], h_act,
                     preferred_element_type=jnp.float32)   # (1, TT) lane-dense
    o_ref[0] = scores + b2_ref[0]


def activation_unit(query, keys, params):
    """query: (B, ...), keys: (B, T, ...) -> attention scores (B, T, 1)."""
    B, T = keys.shape[0], keys.shape[1]
    keys3 = keys.reshape(B, T, -1)                         # (B, T, D)
    D = keys3.shape[-1]
    q2 = query.reshape(B, -1)
    assert q2.shape[-1] == D, (q2.shape, keys3.shape)

    w1 = params["w1"].astype(jnp.float32)                  # (4D, H)
    b1 = params["b1"].astype(jnp.float32).reshape(1, -1)   # (1, H)
    alpha = params["alpha"].astype(jnp.float32).reshape(-1)  # (H,)
    w2 = params["w2"].astype(jnp.float32)                  # (H, 1)
    b2 = params["b2"].astype(jnp.float32)
    H = w1.shape[1]

    # Fold the [q, k, q-k, q*k] concat AND the query into per-batch weights:
    #   h = k @ (Wk + diag(q) Wqk) + (q @ Wq + b1)
    wq = w1[:D] + w1[2 * D:3 * D]                          # (D, H)
    wk = w1[D:2 * D] - w1[2 * D:3 * D]                     # (D, H)
    wqk = w1[3 * D:]                                       # (D, H)
    q32 = q2.astype(jnp.float32)
    wbT = wk.T[None] + q32[:, None, :] * wqk.T[None]       # (B, H, D)
    biasT = (q32 @ wq + b1).reshape(B, H, 1)               # (B, H, 1)
    w2t = w2.reshape(1, H)                                  # (1, H)
    b2s = b2.reshape(-1)[:1]                                # (1,) -> SMEM

    # Keys streamed in their native precision (bf16 halves HBM traffic on the
    # double read); all accumulation / elementwise math stays f32 in-kernel.
    compute_dtype = jnp.bfloat16 if keys.dtype == jnp.bfloat16 else jnp.float32
    kT = jnp.transpose(keys3, (0, 2, 1)).astype(compute_dtype)   # (B, D, T)
    wbT = wbT.astype(compute_dtype)

    # Time tiling: small T uses the full (un-padded) extent in one tile; long
    # sequences tile at 512 (multiple of 128 -> lane-dense tiles and stores).
    if T <= MAX_TILE_T:
        TT, T_pad = T, T
    else:
        TT = MAX_TILE_T
        T_pad = _round_up(T, TT)
    NT = T_pad // TT
    if T_pad != T:
        kT = jnp.pad(kT, ((0, 0), (0, 0), (0, T_pad - T)))

    kt_spec = pl.BlockSpec((1, D, TT), lambda b, t: (b, 0, t))
    wbT_spec = pl.BlockSpec((1, H, D), lambda b, t: (b, 0, 0))
    biasT_spec = pl.BlockSpec((1, H, 1), lambda b, t: (b, 0, 0))
    stat_spec = pl.BlockSpec((1, H, 1), lambda b, t: (b, 0, 0))

    vmem_limit = 32 * 1024 * 1024   # explicit: safe on v5e/v6e/v7x budgets

    # ---- Pass 1: per-batch partial sums for the Dice batch statistics. -----
    psum, psq = pl.pallas_call(
        functools.partial(_stats_kernel, seq_len=T, needs_mask=(T_pad != T)),
        grid=(B, NT),
        in_specs=[kt_spec, wbT_spec, biasT_spec],
        out_specs=(stat_spec, stat_spec),
        out_shape=(jax.ShapeDtypeStruct((B, H, 1), jnp.float32),
                   jax.ShapeDtypeStruct((B, H, 1), jnp.float32)),
        compiler_params=pltpu.CompilerParams(
            dimension_semantics=("parallel", "arbitrary"),
            vmem_limit_bytes=vmem_limit),
    )(kT, wbT, biasT)

    # Tiny (B,H) -> (H,) finalize in XLA: biased (train-mode BN) variance.
    # NOTE: E[h^2]-mean^2 is cancellation-prone if |mean|>>std; fine at the
    # module's tolerances, revisit (shifted/Welford) if they tighten.
    n = jnp.float32(B * T)
    ssum = jnp.sum(psum[:, :, 0], axis=0)                  # (H,)
    ssq = jnp.sum(psq[:, :, 0], axis=0)
    mean = ssum / n
    var = jnp.maximum(ssq / n - mean * mean, 0.0)
    istd = jax.lax.rsqrt(var + DICE_EPS)
    consts = jnp.stack([mean, istd, alpha, 1.0 - alpha], axis=1)  # (H, 4)

    # ---- Pass 2: Dice gate + H->1 projection, lane-dense score rows. -------
    flops = 2 * B * T_pad * H * (D + 1)
    bytes_accessed = (kT.size * kT.dtype.itemsize
                      + wbT.size * wbT.dtype.itemsize
                      + 4 * (B * H + 4 * H + H + B * T_pad))
    scores = pl.pallas_call(
        _apply_kernel,
        grid=(B, NT),
        in_specs=[kt_spec, wbT_spec, biasT_spec,
                  pl.BlockSpec((H, 4), lambda b, t: (0, 0)),
                  pl.BlockSpec((1, H), lambda b, t: (0, 0)),
                  pl.BlockSpec(memory_space=pltpu.MemorySpace.SMEM)],
        out_specs=pl.BlockSpec((1, 1, TT), lambda b, t: (b, 0, t)),
        out_shape=jax.ShapeDtypeStruct((B, 1, T_pad), jnp.float32),
        compiler_params=pltpu.CompilerParams(
            dimension_semantics=("parallel", "parallel"),
            vmem_limit_bytes=vmem_limit),
        cost_estimate=pl.CostEstimate(flops=flops,
                                      transcendentals=B * T_pad * H,
                                      bytes_accessed=bytes_accessed),
    )(kT, wbT, biasT, consts, w2t, b2s)

    return scores[:, 0, :T][..., None]                     # (B, T, 1)


def activation_unit_reference(query, keys, params):
    """Pure-JAX reference matching the PyTorch module (train-mode Dice BN)."""
    B, T = keys.shape[0], keys.shape[1]
    k2 = keys.reshape(B, T, -1)
    D = k2.shape[-1]
    q2 = query.reshape(B, -1)
    qr = jnp.broadcast_to(q2[:, None, :], (B, T, D))
    x = jnp.concatenate([qr, k2, qr - k2, qr * k2], axis=-1).reshape(B * T, 4 * D)
    h = x @ params["w1"] + params["b1"]
    mean = h.mean(axis=0, keepdims=True)
    var = ((h - mean) ** 2).mean(axis=0, keepdims=True)    # biased, train-mode BN
    p = jax.nn.sigmoid((h - mean) * jax.lax.rsqrt(var + DICE_EPS))
    h_act = p * h + params["alpha"] * (1.0 - p) * h
    out = h_act @ params["w2"] + params["b2"]
    return out.reshape(B, T, 1)


def init_params(key, input_dim, hidden_size):
    """Deterministic synthetic parameters matching the nn.Module shapes."""
    k1, k2, k3, k4 = jax.random.split(key, 4)
    in_dim = 4 * input_dim
    lim1 = 1.0 / jnp.sqrt(in_dim)
    lim2 = 1.0 / jnp.sqrt(hidden_size)
    return {
        "w1": jax.random.uniform(k1, (in_dim, hidden_size), jnp.float32, -lim1, lim1),
        "b1": jax.random.uniform(k2, (1, hidden_size), jnp.float32, -lim1, lim1),
        "alpha": jnp.zeros((1, hidden_size), jnp.float32),   # Dice alpha init
        "w2": jax.random.uniform(k3, (hidden_size, 1), jnp.float32, -lim2, lim2),
        "b2": jax.random.uniform(k4, (1, 1), jnp.float32, -lim2, lim2),
    }


if __name__ == "__main__":
    B, T, D, H = 2, 8, 16, 32   # batch, timesteps, embedding_dim, hidden_size

    key = jax.random.PRNGKey(0)
    k_params, k_q, k_k = jax.random.split(key, 3)

    params = init_params(k_params, input_dim=D, hidden_size=H)
    query = jax.random.normal(k_q, (B, D), jnp.float32)
    keys = jax.random.normal(k_k, (B, T, D), jnp.float32)

    scores = activation_unit(query, keys, params)
    jax.block_until_ready(scores)
    assert scores.shape == (B, T, 1), scores.shape

    ref = activation_unit_reference(query, keys, params)
    max_err = float(jnp.max(jnp.abs(scores - ref)))
    assert jnp.allclose(scores, ref, rtol=2e-3, atol=2e-3), max_err

    print("KERNEL_OK")
</pallas_src>

<mosaic_0001>
module attributes {stable_mosaic.version = 11 : i64} {
  func.func @_stats_kernel(%arg0: i32, %arg1: i32, %arg2: memref<1x16x8xf32, #tpu.memory_space<vmem>>, %arg3: memref<1x32x16xf32, #tpu.memory_space<vmem>>, %arg4: memref<1x32x1xf32, #tpu.memory_space<vmem>>, %arg5: memref<1x32x1xf32, #tpu.memory_space<vmem>>, %arg6: memref<1x32x1xf32, #tpu.memory_space<vmem>>) attributes {dimension_semantics = [#tpu.dimension_semantics<parallel>, #tpu.dimension_semantics<arbitrary>], iteration_bounds = array<i64: 2, 1>, scalar_prefetch = 0 : i64, scratch_operands = 0 : i64, tpu.core_type = #tpu.core_type<tc>, window_params = [{transform_indices = @transform_0, window_bounds = array<i64: 1, 16, 8>}, {transform_indices = @transform_1, window_bounds = array<i64: 1, 32, 16>}, {transform_indices = @transform_2, window_bounds = array<i64: 1, 32, 1>}, {transform_indices = @transform_3, window_bounds = array<i64: 1, 32, 1>}, {transform_indices = @transform_4, window_bounds = array<i64: 1, 32, 1>}]} {
    %c0 = arith.constant 0 : index
    %c0_0 = arith.constant 0 : index
    %c0_1 = arith.constant 0 : index
    %0 = vector.load %arg3[%c0, %c0_0, %c0_1] : memref<1x32x16xf32, #tpu.memory_space<vmem>>, vector<1x32x16xf32>
    %1 = vector.shape_cast %0 : vector<1x32x16xf32> to vector<32x16xf32>
    %c0_2 = arith.constant 0 : index
    %c0_3 = arith.constant 0 : index
    %c0_4 = arith.constant 0 : index
    %2 = vector.load %arg2[%c0_2, %c0_3, %c0_4] : memref<1x16x8xf32, #tpu.memory_space<vmem>>, vector<1x16x8xf32>
    %3 = vector.shape_cast %2 : vector<1x16x8xf32> to vector<16x8xf32>
    %cst = arith.constant dense<0.000000e+00> : vector<32x8xf32>
    %4 = tpu.matmul %1, %3, %cst {dimension_numbers = #tpu.dot_dimension_numbers<[1], [0], [0], [1], [0, 0, 1, 1], [], []>} : vector<32x16xf32>, vector<16x8xf32>, vector<32x8xf32> -> vector<32x8xf32>
    %c0_5 = arith.constant 0 : index
    %c0_6 = arith.constant 0 : index
    %c0_7 = arith.constant 0 : index
    %5 = vector.load %arg4[%c0_5, %c0_6, %c0_7] : memref<1x32x1xf32, #tpu.memory_space<vmem>>, vector<1x32x1xf32>
    %6 = vector.shape_cast %5 : vector<1x32x1xf32> to vector<32x1xf32>
    %7 = vector.broadcast %6 : vector<32x1xf32> to vector<32x8xf32>
    %8 = arith.addf %4, %7 : vector<32x8xf32>
    %c0_i32 = arith.constant 0 : i32
    %9 = arith.cmpi eq, %arg1, %c0_i32 : i32
    %10 = arith.extui %9 : i1 to i32
    %c0_i32_8 = arith.constant 0 : i32
    %11 = arith.cmpi ne, %10, %c0_i32_8 : i32
    scf.if %11 {
      %cst_23 = arith.constant 0.000000e+00 : f32
      %29 = vector.broadcast %cst_23 : f32 to vector<1x32x1xf32>
      %c0_24 = arith.constant 0 : index
      %c0_25 = arith.constant 0 : index
      %c0_26 = arith.constant 0 : index
      %30 = vector.load %arg5[%c0_24, %c0_25, %c0_26] : memref<1x32x1xf32, #tpu.memory_space<vmem>>, vector<1x32x1xf32>
      tpu.vector_store %arg5[%c0_24, %c0_25, %c0_26], %29 {strides = array<i32>} : memref<1x32x1xf32, #tpu.memory_space<vmem>>, vector<1x32x1xf32>,
      %cst_27 = arith.constant 0.000000e+00 : f32
      %31 = vector.broadcast %cst_27 : f32 to vector<1x32x1xf32>
      %c0_28 = arith.constant 0 : index
      %c0_29 = arith.constant 0 : index
      %c0_30 = arith.constant 0 : index
      %32 = vector.load %arg6[%c0_28, %c0_29, %c0_30] : memref<1x32x1xf32, #tpu.memory_space<vmem>>, vector<1x32x1xf32>
      tpu.vector_store %arg6[%c0_28, %c0_29, %c0_30], %31 {strides = array<i32>} : memref<1x32x1xf32, #tpu.memory_space<vmem>>, vector<1x32x1xf32>,
    } else {
    }
    %c0_9 = arith.constant 0 : index
    %c0_10 = arith.constant 0 : index
    %c0_11 = arith.constant 0 : index
    %12 = vector.load %arg5[%c0_9, %c0_10, %c0_11] : memref<1x32x1xf32, #tpu.memory_space<vmem>>, vector<1x32x1xf32>
    %13 = vector.shape_cast %12 : vector<1x32x1xf32> to vector<32x1xf32>
    %cst_12 = arith.constant dense<0.000000e+00> : vector<32xf32>
    %14 = vector.multi_reduction <add>, %8, %cst_12 [1] : vector<32x8xf32> to vector<32xf32>
    %15 = vector.shape_cast %14 : vector<32xf32> to vector<32x1xf32>
    %16 = arith.addf %13, %15 : vector<32x1xf32>
    %c0_13 = arith.constant 0 : index
    %c0_14 = arith.constant 0 : index
    %c0_15 = arith.constant 0 : index
    %17 = vector.load %arg5[%c0_13, %c0_14, %c0_15] : memref<1x32x1xf32, #tpu.memory_space<vmem>>, vector<1x32x1xf32>
    %18 = vector.shape_cast %17 : vector<1x32x1xf32> to vector<32x1xf32>
    %19 = vector.shape_cast %16 : vector<32x1xf32> to vector<1x32x1xf32>
    tpu.vector_store %arg5[%c0_13, %c0_14, %c0_15], %19 {strides = array<i32>} : memref<1x32x1xf32, #tpu.memory_space<vmem>>, vector<1x32x1xf32>,
    %c0_16 = arith.constant 0 : index
    %c0_17 = arith.constant 0 : index
    %c0_18 = arith.constant 0 : index
    %20 = vector.load %arg6[%c0_16, %c0_17, %c0_18] : memref<1x32x1xf32, #tpu.memory_space<vmem>>, vector<1x32x1xf32>
    %21 = vector.shape_cast %20 : vector<1x32x1xf32> to vector<32x1xf32>
    %22 = arith.mulf %8, %8 : vector<32x8xf32>
    %cst_19 = arith.constant dense<0.000000e+00> : vector<32xf32>
    %23 = vector.multi_reduction <add>, %22, %cst_19 [1] : vector<32x8xf32> to vector<32xf32>
    %24 = vector.shape_cast %23 : vector<32xf32> to vector<32x1xf32>
    %25 = arith.addf %21, %24 : vector<32x1xf32>
    %c0_20 = arith.constant 0 : index
    %c0_21 = arith.constant 0 : index
    %c0_22 = arith.constant 0 : index
    %26 = vector.load %arg6[%c0_20, %c0_21, %c0_22] : memref<1x32x1xf32, #tpu.memory_space<vmem>>, vector<1x32x1xf32>
    %27 = vector.shape_cast %26 : vector<1x32x1xf32> to vector<32x1xf32>
    %28 = vector.shape_cast %25 : vector<32x1xf32> to vector<1x32x1xf32>
    tpu.vector_store %arg6[%c0_20, %c0_21, %c0_22], %28 {strides = array<i32>} : memref<1x32x1xf32, #tpu.memory_space<vmem>>, vector<1x32x1xf32>,
    return
  }
  func.func @transform_0(%arg0: i32, %arg1: i32) -> (i32, i32, i32) {
    %c0_i32 = arith.constant 0 : i32
    %c0_i32_0 = arith.constant 0 : i32
    return %arg0, %c0_i32, %arg1 : i32, i32, i32
  }
  func.func @transform_1(%arg0: i32, %arg1: i32) -> (i32, i32, i32) {
    %c0_i32 = arith.constant 0 : i32
    %c0_i32_0 = arith.constant 0 : i32
    %c0_i32_1 = arith.constant 0 : i32
    return %arg0, %c0_i32, %c0_i32_0 : i32, i32, i32
  }
  func.func @transform_2(%arg0: i32, %arg1: i32) -> (i32, i32, i32) {
    %c0_i32 = arith.constant 0 : i32
    %c0_i32_0 = arith.constant 0 : i32
    %c0_i32_1 = arith.constant 0 : i32
    return %arg0, %c0_i32, %c0_i32_0 : i32, i32, i32
  }
  func.func @transform_3(%arg0: i32, %arg1: i32) -> (i32, i32, i32) {
    %c0_i32 = arith.constant 0 : i32
    %c0_i32_0 = arith.constant 0 : i32
    %c0_i32_1 = arith.constant 0 : i32
    return %arg0, %c0_i32, %c0_i32_0 : i32, i32, i32
  }
  func.func @transform_4(%arg0: i32, %arg1: i32) -> (i32, i32, i32) {
    %c0_i32 = arith.constant 0 : i32
    %c0_i32_0 = arith.constant 0 : i32
    %c0_i32_1 = arith.constant 0 : i32
    return %arg0, %c0_i32, %c0_i32_0 : i32, i32, i32
  }
}

</mosaic_0001>

<llo_original>
// kernel: tpu_custom_call.1
$region0: #{tpu_custom_call.1}
  #allocation0 [shape = 'u32[]', space=smem, size = 0x4, offset = 0x4, fixed_abs, tag = 'smem constant byte address 0x4 - core index']
  #allocation1 [shape = 'u32[144,128]{1,0:T(1,128)}', space=vmem, size = 0x12000, scoped, tag = 'internal scratch']
  %s0 = inlined_call_operand.vmem [shape: f32[2,16,8], index: 0, kind: input, shape index: {}]
  %s1 = inlined_call_operand.vmem [shape: f32[2,32,16], index: 1, kind: input, shape index: {}]
  %s2 = inlined_call_operand.vmem [shape: f32[2,32,1], index: 2, kind: input, shape index: {}]
  %s3 = inlined_call_operand.vmem [shape: f32[2,32,1], index: 3, kind: output, shape index: {0}]
  %s4 = inlined_call_operand.vmem [shape: f32[2,32,1], index: 4, kind: output, shape index: {1}]
  %5 = xla_tuple %s3, %s4
  %s6 = sld [smem:[#allocation0]]
  $region57: #{tpu_custom_call.1} parent=0
    _
  %s8 = ssub.s32 1, %s6
  %s9 = scalar_select 0, %s8, %s6
  loop: start=0, step=1, limit=4
  $region2: #{tpu_custom_call.1} parent=0 // loop_pre_header
    _
  $region3: #{tpu_custom_call.1} parent=0 // loop_header
    %s11 = sphi 0, %s15
    %p12 = scmp.ge.s32.totalorder %s11, 4
    %s18 = sphi 0, %s30
    %s19 = sphi 0, %s26
    %s20 = sphi 0, %s18
    %s21 = sphi 0, %s19
    %s22 = sphi 0, %s20
    %s23 = sphi 0, %s21
    %s35 = sphi 0, %s37
    %s38 = sphi 0, %s35
    %s39 = sphi 0, %s38
    %s55 = sphi 0, %s39
    %s61 = sphi 0, %s63
    %s64 = sphi 0, %s61
    %s65 = sphi 0, %s64
    %s81 = sphi 0, %s65
    %s87 = sphi 0, %s89
    %s90 = sphi 0, %s87
    %s91 = sphi 0, %s90
    %s107 = sphi 0, %s91
    %s113 = sphi 0, %s115
    %s116 = sphi 0, %s113
    %s117 = sphi 0, %s116
    %s133 = sphi 0, %s117
    %s139 = sphi 0, %s141
    %s142 = sphi 0, %s139
    %s143 = sphi 0, %s142
    %s159 = sphi 0, %s143
  $region4: #{tpu_custom_call.1} parent=0 // loop_header_branch
    %14 = sbr.rel (%p12) target = $region8
  $region5: #{tpu_custom_call.1} parent=0 // loop_body
    %s16 = ssub.s32 %s11, 1
    %s17 = ssub.s32 %s11, 2
    %s24 = sadd.s32 1, %s19
    %p25 = scmp.ge.s32.totalorder %s24, 1
    %s26 = scalar_select %p25, 0, %s24
    %s27 = sadd.s32 1, %s18
    %s28 = scalar_select %p25, %s27, %s18
    %p29 = scmp.ge.s32.totalorder %s28, 2
    %s30 = scalar_select %p29, 0, %s28
    %s31 = ssub.s32 %s18, %s30
    %s32 = ssub.s32 %s19, %s26
    %s33 = sor.u32 %s31, %s32
    %p34 = scmp.eq.s32.totalorder %s33, 0
    %s36 = sadd.s32 %s35, 1
    %s37 = scalar_select %p34, %s35, %s36
    %p40 = pneg %p34
    %p41 = scmp.eq.s32.totalorder %s11, 1
    %p42 = por %p40, %p41
    %p43 = scmp.ne.s32.totalorder %s35, %s38
    %p44 = scmp.eq.s32.totalorder %s11, 0
    %p45 = por %p43, %p44
    %p46 = scmp.ne.s32.totalorder %s35, %s38
    %p47 = scmp.eq.s32.totalorder %s16, 1
    %p48 = por %p46, %p47
    %p49 = scmp.ne.s32.totalorder %s38, %s39
    %p50 = scmp.eq.s32.totalorder %s16, 0
    %p51 = por %p49, %p50
    %p52 = scmp.ne.s32.totalorder %s38, %s39
    %p53 = scmp.eq.s32.totalorder %s17, 1
    %p54 = por %p52, %p53
    %p56 = scmp.ne.s32.totalorder %s39, %s55
    %p57 = scmp.eq.s32.totalorder %s17, 0
    %p58 = por %p56, %p57
    %s59 = ssub.s32 %s18, %s30
    %p60 = scmp.eq.s32.totalorder %s59, 0
    %s62 = sadd.s32 %s61, 1
    %s63 = scalar_select %p60, %s61, %s62
    %p66 = pneg %p60
    %p67 = scmp.eq.s32.totalorder %s11, 1
    %p68 = por %p66, %p67
    %p69 = scmp.ne.s32.totalorder %s61, %s64
    %p70 = scmp.eq.s32.totalorder %s11, 0
    %p71 = por %p69, %p70
    %p72 = scmp.ne.s32.totalorder %s61, %s64
    %p73 = scmp.eq.s32.totalorder %s16, 1
    %p74 = por %p72, %p73
    %p75 = scmp.ne.s32.totalorder %s64, %s65
    %p76 = scmp.eq.s32.totalorder %s16, 0
    %p77 = por %p75, %p76
    %p78 = scmp.ne.s32.totalorder %s64, %s65
    %p79 = scmp.eq.s32.totalorder %s17, 1
    %p80 = por %p78, %p79
    %p82 = scmp.ne.s32.totalorder %s65, %s81
    %p83 = scmp.eq.s32.totalorder %s17, 0
    %p84 = por %p82, %p83
    %s85 = ssub.s32 %s18, %s30
    %p86 = scmp.eq.s32.totalorder %s85, 0
    %s88 = sadd.s32 %s87, 1
    %s89 = scalar_select %p86, %s87, %s88
    %p92 = pneg %p86
    %p93 = scmp.eq.s32.totalorder %s11, 1
    %p94 = por %p92, %p93
    %p95 = scmp.ne.s32.totalorder %s87, %s90
    %p96 = scmp.eq.s32.totalorder %s11, 0
    %p97 = por %p95, %p96
    %p98 = scmp.ne.s32.totalorder %s87, %s90
    %p99 = scmp.eq.s32.totalorder %s16, 1
    %p100 = por %p98, %p99
    %p101 = scmp.ne.s32.totalorder %s90, %s91
    %p102 = scmp.eq.s32.totalorder %s16, 0
    %p103 = por %p101, %p102
    %p104 = scmp.ne.s32.totalorder %s90, %s91
    %p105 = scmp.eq.s32.totalorder %s17, 1
    %p106 = por %p104, %p105
    %p108 = scmp.ne.s32.totalorder %s91, %s107
    %p109 = scmp.eq.s32.totalorder %s17, 0
    %p110 = por %p108, %p109
    %s111 = ssub.s32 %s18, %s30
    %p112 = scmp.eq.s32.totalorder %s111, 0
    %s114 = sadd.s32 %s113, 1
    %s115 = scalar_select %p112, %s113, %s114
    %p118 = pneg %p112
    %p119 = scmp.eq.s32.totalorder %s11, 1
    %p120 = por %p118, %p119
    %p121 = scmp.ne.s32.totalorder %s113, %s116
    %p122 = scmp.eq.s32.totalorder %s11, 0
    %p123 = por %p121, %p122
    %p124 = scmp.ne.s32.totalorder %s113, %s116
    %p125 = scmp.eq.s32.totalorder %s16, 1
    %p126 = por %p124, %p125
    %p127 = scmp.ne.s32.totalorder %s116, %s117
    %p128 = scmp.eq.s32.totalorder %s16, 0
    %p129 = por %p127, %p128
    %p130 = scmp.ne.s32.totalorder %s116, %s117
    %p131 = scmp.eq.s32.totalorder %s17, 1
    %p132 = por %p130, %p131
    %p134 = scmp.ne.s32.totalorder %s117, %s133
    %p135 = scmp.eq.s32.totalorder %s17, 0
    %p136 = por %p134, %p135
    %s137 = ssub.s32 %s18, %s30
    %p138 = scmp.eq.s32.totalorder %s137, 0
    %s140 = sadd.s32 %s139, 1
    %s141 = scalar_select %p138, %s139, %s140
    %p144 = pneg %p138
    %p145 = scmp.eq.s32.totalorder %s11, 1
    %p146 = por %p144, %p145
    %p147 = scmp.ne.s32.totalorder %s139, %s142
    %p148 = scmp.eq.s32.totalorder %s11, 0
    %p149 = por %p147, %p148
    %p150 = scmp.ne.s32.totalorder %s139, %s142
    %p151 = scmp.eq.s32.totalorder %s16, 1
    %p152 = por %p150, %p151
    %p153 = scmp.ne.s32.totalorder %s142, %s143
    %p154 = scmp.eq.s32.totalorder %s16, 0
    %p155 = por %p153, %p154
    %p156 = scmp.ne.s32.totalorder %s142, %s143
    %p157 = scmp.eq.s32.totalorder %s17, 1
    %p158 = por %p156, %p157
    %p160 = scmp.ne.s32.totalorder %s143, %s159
    %p161 = scmp.eq.s32.totalorder %s17, 0
    %p162 = por %p160, %p161
    %p163 = scmp.le.s32.totalorder 1, %s11
    %p164 = scmp.lt.s32.totalorder %s11, 3
    %p165 = pnand %p163, %p164
    %p166 = pneg %p165
    // Predicated region
    $region9: #{tpu_custom_call.1} parent=5 // pred_check
      _
    $region10: #{tpu_custom_call.1} parent=5 // pred_check_branch
      %168 = sbr.rel (%p165) target = $region12
    $region11: #{tpu_custom_call.1} parent=5 // pred_region
      %s169 = ssub.s32 %s11, 1
    $region12: #{tpu_custom_call.1} parent=5 // pred_fallthru
      _
    %p170 = scmp.lt.s32.totalorder %s11, 2
    // Predicated region
    $region13: #{tpu_custom_call.1} parent=5 // pred_check
      %p171 = pneg %p170
    $region14: #{tpu_custom_call.1} parent=5 // pred_check_branch
      %173 = sbr.rel (%p171) target = $region16
    $region15: #{tpu_custom_call.1} parent=5 // pred_region
      // Predicated region
      $region17: #{tpu_custom_call.1} parent=15 // pred_check
        %p174 = pneg %p45
      $region18: #{tpu_custom_call.1} parent=15 // pred_check_branch
        %176 = sbr.rel (%p174) target = $region20
      $region19: #{tpu_custom_call.1} parent=15 // pred_region
        %p177 = scmp.lt.s32.totalorder %s18, 1
        %s178 = scalar_select %p177, %s18, 1
        %p179 = scmp.lt.s32.totalorder %s19, 0
        %s180 = scalar_select %p179, %s19, 0
        %s181 = smul.addr %s178, 2
        %s182 = sadd.s32 %s180, %s181
        %s183 = smul.addr %s182, 8
        %s184 = scalar_lea.vmem %s0, %s183
      $region20: #{tpu_custom_call.1} parent=15 // pred_fallthru
        _
      // Predicated region
      $region21: #{tpu_custom_call.1} parent=15 // pred_check
        %p185 = pneg %p71
      $region22: #{tpu_custom_call.1} parent=15 // pred_check_branch
        %187 = sbr.rel (%p185) target = $region24
      $region23: #{tpu_custom_call.1} parent=15 // pred_region
        %p188 = scmp.lt.s32.totalorder %s18, 1
        %s189 = scalar_select %p188, %s18, 1
        %s190 = smul.addr %s189, 4
        %s191 = smul.addr %s190, 8
        %s192 = scalar_lea.vmem %s1, %s191
      $region24: #{tpu_custom_call.1} parent=15 // pred_fallthru
        _
      // Predicated region
      $region25: #{tpu_custom_call.1} parent=15 // pred_check
        %p193 = pneg %p97
      $region26: #{tpu_custom_call.1} parent=15 // pred_check_branch
        %195 = sbr.rel (%p193) target = $region28
      $region27: #{tpu_custom_call.1} parent=15 // pred_region
        %p196 = scmp.lt.s32.totalorder %s18, 1
        %s197 = scalar_select %p196, %s18, 1
        %s198 = smul.addr %s197, 4
        %s199 = smul.addr %s198, 8
        %s200 = scalar_lea.vmem %s2, %s199
      $region28: #{tpu_custom_call.1} parent=15 // pred_fallthru
        _
    $region16: #{tpu_custom_call.1} parent=5 // pred_fallthru
      _
    %p201 = scmp.le.s32.totalorder 1, %s11
    %p202 = scmp.lt.s32.totalorder %s11, 3
    %p203 = pnand %p201, %p202
    %p204 = pneg %p203
    // Predicated region
    $region29: #{tpu_custom_call.1} parent=5 // pred_check
      _
    $region30: #{tpu_custom_call.1} parent=5 // pred_check_branch
      %206 = sbr.rel (%p203) target = $region32
    $region31: #{tpu_custom_call.1} parent=5 // pred_region
      %s207 = ssub.s32 %s11, 1
      %p208 = scmp.lt.s32.totalorder %s20, 1
      %s209 = scalar_select %p208, %s20, 1
      %p210 = scmp.lt.s32.totalorder %s21, 0
      %s211 = scalar_select %p210, %s21, 0
      %s212 = smul.addr %s209, 2
      %s213 = sadd.s32 %s211, %s212
      %s214 = smul.addr %s213, 8
      %s215 = scalar_lea.vmem %s0, %s214
      %p216 = pneg %p51
      %p217 = pneg %p48
      %p218 = scmp.lt.s32.totalorder %s20, 1
      %s219 = scalar_select %p218, %s20, 1
      %s220 = smul.addr %s219, 4
      %s221 = smul.addr %s220, 8
      %s222 = scalar_lea.vmem %s1, %s221
      %p223 = pneg %p77
      %p224 = pneg %p74
      %p225 = scmp.lt.s32.totalorder %s20, 1
      %s226 = scalar_select %p225, %s20, 1
      %s227 = smul.addr %s226, 4
      %s228 = smul.addr %s227, 8
      %s229 = scalar_lea.vmem %s2, %s228
      %p230 = pneg %p103
      %p231 = pneg %p100
      %p232 = pneg %p129
      %p233 = pneg %p126
      %p234 = scmp.lt.s32.totalorder %s20, 1
      %s235 = scalar_select %p234, %s20, 1
      %s236 = smul.addr %s235, 4
      %s237 = smul.addr %s236, 8
      %s238 = scalar_lea.vmem %s3, %s237
      %p239 = pneg %p155
      %p240 = pneg %p152
      %p241 = scmp.lt.s32.totalorder %s20, 1
      %s242 = scalar_select %p241, %s20, 1
      %s243 = smul.addr %s242, 4
      %s244 = smul.addr %s243, 8
      %s245 = scalar_lea.vmem %s4, %s244
      %p246 = scmp.lt.s32.totalorder %s20, 1
      %s247 = scalar_select %p246, %s20, 1
      %p248 = scmp.lt.s32.totalorder %s21, 0
      %s249 = scalar_select %p248, %s21, 0
      %s250 = smul.addr %s247, 2
      %s251 = sadd.s32 %s249, %s250
      %s252 = smul.addr %s251, 8
      %s253 = scalar_lea.vmem %s0, %s252
      %p254 = scmp.lt.s32.totalorder %s20, 1
      %s255 = scalar_select %p254, %s20, 1
      %s256 = smul.addr %s255, 4
      %s257 = smul.addr %s256, 8
      %s258 = scalar_lea.vmem %s1, %s257
      %p259 = scmp.lt.s32.totalorder %s20, 1
      %s260 = scalar_select %p259, %s20, 1
      %s261 = smul.addr %s260, 4
      %s262 = smul.addr %s261, 8
      %s263 = scalar_lea.vmem %s2, %s262
      %p264 = scmp.lt.s32.totalorder %s20, 1
      %s265 = scalar_select %p264, %s20, 1
      %s266 = smul.addr %s265, 4
      %s267 = smul.addr %s266, 8
      %s268 = scalar_lea.vmem %s3, %s267
      %p269 = scmp.lt.s32.totalorder %s20, 1
      %s270 = scalar_select %p269, %s20, 1
      %s271 = smul.addr %s270, 4
      %s272 = smul.addr %s271, 8
      %s273 = scalar_lea.vmem %s4, %s272
      %v274 = vld [vmem:[%s258] sm:$0xff]
      %v275 = vld [vmem:[%s258 + $0x8] sm:$0xff]
      %v276 = vld [vmem:[%s258 + $0x10] sm:$0xff]
      %v277 = vld [vmem:[%s258 + $0x18] sm:$0xff]
      %v278 = vld [vmem:[%s253] sm:$0xff]
      %v279 = vld [vmem:[%s253 + $0x8] sm:$0xff]
      %v280 = vld [vmem:[%s263] sm:$0xff]
      %v281 = vld [vmem:[%s263 + $0x8] sm:$0xff]
      %v282 = vld [vmem:[%s263 + $0x10] sm:$0xff]
      %v283 = vld [vmem:[%s263 + $0x18] sm:$0xff]
      %285 = vset.pattern.permute.xlu0 0
      %286 = vperm.xlu0 %285, %v280
      %v287 = vpop.permute.xlu0 %286
      %290 = vset.pattern.permute.xlu0 0
      %291 = vperm.xlu0 %290, %v281
      %v292 = vpop.permute.xlu0 %291
      %295 = vset.pattern.permute.xlu0 0
      %296 = vperm.xlu0 %295, %v282
      %v297 = vpop.permute.xlu0 %296
      %300 = vset.pattern.permute.xlu0 0
      %301 = vperm.xlu0 %300, %v283
      %v302 = vpop.permute.xlu0 %301
      %vm304 = vcmask 130048
      %v306 = vsel %vm304, %v274, 0
      %v309 = vsel %vm304, %v275, 0
      %v312 = vsel %vm304, %v276, 0
      %v315 = vsel %vm304, %v277, 0
      %317 = vmatprep.subr.mxu0 0.0
      %318 = vmatpush1.msra.mxu0 %v278
      %319 = vmatprep.subr.mxu0 0.0
      %320 = vmatpush1.msra.mxu0 %v279
      %321 = vmatprep.subr.mxu0 0.0
      %322 = vmatpush1.msra.mxu0 0.0
      %323 = vmatprep.subr.mxu0 0.0
      %324 = vmatpush1.msra.mxu0 0.0
      %325 = vmatprep.subr.mxu0 0.0
      %326 = vmatpush1.msra.mxu0 0.0
      %327 = vmatprep.subr.mxu0 0.0
      %328 = vmatpush1.msra.mxu0 0.0
      %329 = vmatprep.subr.mxu0 0.0
      %330 = vmatpush1.msra.mxu0 0.0
      %331 = vmatprep.subr.mxu0 0.0
      %332 = vmatpush1.msra.mxu0 0.0
      %333 = vmatprep.subr.mxu0 0.0
      %334 = vmatpush1.msra.mxu0 0.0
      %335 = vmatprep.subr.mxu0 0.0
      %336 = vmatpush1.msra.mxu0 0.0
      %337 = vmatprep.subr.mxu0 0.0
      %338 = vmatpush1.msra.mxu0 0.0
      %339 = vmatprep.subr.mxu0 0.0
      %340 = vmatpush1.msra.mxu0 0.0
      %341 = vmatprep.subr.mxu0 0.0
      %342 = vmatpush1.msra.mxu0 0.0
      %343 = vmatprep.subr.mxu0 0.0
      %344 = vmatpush1.msra.mxu0 0.0
      %345 = vmatprep.subr.mxu0 0.0
      %346 = vmatpush1.msra.mxu0 0.0
      %347 = vmatprep.subr.mxu0 0.0
      %348 = vmatpush1.msra.mxu0 0.0
      %349 = vmatprep.subr.mxu0 0.0
      %350 = vmatpush1.msra.mxu0 0.0
      %351 = vmatprep.subr.mxu0 0.0
      %352 = vmatpush1.msra.mxu0 0.0
      %353 = vmatprep.subr.mxu0 0.0
      %354 = vmatpush1.msra.mxu0 0.0
      %355 = vmatprep.subr.mxu0 0.0
      %356 = vmatpush1.msra.mxu0 0.0
      %357 = vmatprep.subr.mxu0 0.0
      %358 = vmatpush1.msra.mxu0 0.0
      %359 = vmatprep.subr.mxu0 0.0
      %360 = vmatpush1.msra.mxu0 0.0
      %361 = vmatprep.subr.mxu0 0.0
      %362 = vmatpush1.msra.mxu0 0.0
      %363 = vmatprep.subr.mxu0 0.0
      %364 = vmatpush1.msra.mxu0 0.0
      %365 = vmatprep.subr.mxu0 0.0
      %366 = vmatpush1.msra.mxu0 0.0
      %367 = vmatprep.subr.mxu0 0.0
      %368 = vmatpush1.msra.mxu0 0.0
      %369 = vmatprep.subr.mxu0 0.0
      %370 = vmatpush1.msra.mxu0 0.0
      %371 = vmatprep.subr.mxu0 0.0
      %372 = vmatpush1.msra.mxu0 0.0
      %373 = vmatprep.subr.mxu0 0.0
      %374 = vmatpush1.msra.mxu0 0.0
      %375 = vmatprep.subr.mxu0 0.0
      %376 = vmatpush1.msra.mxu0 0.0
      %377 = vmatprep.subr.mxu0 0.0
      %378 = vmatpush1.msra.mxu0 0.0
      %379 = vmatprep.subr.mxu0 0.0
      %380 = vmatpush1.msra.mxu0 0.0
      %381 = vmatprep.mubr.f32.mxu0 0.0
      %382 = vmatmul.mubr.f32.gmra.mrb[0].mxu0 %v306
      %v383 = vpop.f32.mrb[0].mxu0
      %v384 = vadd.f32 %v287, %v383
      %v385 = vpop.f32.mrb[0].mxu0
      %386 = vmatprep.mubr.f32.mxu0 0.0
      %387 = vmatmul.mubr.f32.gmra.mrb[0].mxu0 %v309
      %v388 = vpop.f32.mrb[0].mxu0
      %v389 = vadd.f32 %v292, %v388
      %v390 = vpop.f32.mrb[0].mxu0
      %391 = vmatprep.mubr.f32.mxu0 0.0
      %392 = vmatmul.mubr.f32.gmra.mrb[0].mxu0 %v312
      %v393 = vpop.f32.mrb[0].mxu0
      %v394 = vadd.f32 %v297, %v393
      %v395 = vpop.f32.mrb[0].mxu0
      %396 = vmatprep.mubr.f32.mxu0 0.0
      %397 = vmatmul.mubr.f32.gmra.mrb[0].mxu0 %v315
      %v398 = vpop.f32.mrb[0].mxu0
      %v399 = vadd.f32 %v302, %v398
      %v400 = vpop.f32.mrb[0].mxu0
      %401 = vdwg.mxu0
      %p402 = scmp.eq.s32.totalorder %s21, 0
      // Predicated region
      $region33: #{tpu_custom_call.1} parent=31 // pred_check
        %p403 = pneg %p402
      $region34: #{tpu_custom_call.1} parent=31 // pred_check_branch
        %405 = sbr.rel (%p403) target = $region36
      $region35: #{tpu_custom_call.1} parent=31 // pred_region
        %vm406 = vcmask 7168
        %407 = vst.msk [vmem:[%s268] sm:$0xff] %vm406, 0.0
        %408 = vst.msk [vmem:[%s268 + $0x8] sm:$0xff] %vm406, 0.0
        %409 = vst.msk [vmem:[%s268 + $0x10] sm:$0xff] %vm406, 0.0
        %410 = vst.msk [vmem:[%s268 + $0x18] sm:$0xff] %vm406, 0.0
        %411 = vst.msk [vmem:[%s273] sm:$0xff] %vm406, 0.0
        %412 = vst.msk [vmem:[%s273 + $0x8] sm:$0xff] %vm406, 0.0
        %413 = vst.msk [vmem:[%s273 + $0x10] sm:$0xff] %vm406, 0.0
        %414 = vst.msk [vmem:[%s273 + $0x18] sm:$0xff] %vm406, 0.0
      $region36: #{tpu_custom_call.1} parent=31 // pred_fallthru
        _
      %v415 = vld [vmem:[%s268] sm:$0xff]
      %v416 = vld [vmem:[%s268 + $0x8] sm:$0xff]
      %v417 = vld [vmem:[%s268 + $0x10] sm:$0xff]
      %v418 = vld [vmem:[%s268 + $0x18] sm:$0xff]
      %vm419 = vcmask 64512
      %v420 = vsel %vm419, %v384, 0.0
      %421 = vadd.xlane.f32.xlu0 %v420
      %v422 = vpop.xlane.xlu0 %421
      %v423 = vsel %vm419, %v389, 0.0
      %424 = vadd.xlane.f32.xlu0 %v423
      %v425 = vpop.xlane.xlu0 %424
      %v426 = vsel %vm419, %v394, 0.0
      %427 = vadd.xlane.f32.xlu0 %v426
      %v428 = vpop.xlane.xlu0 %427
      %v429 = vsel %vm419, %v399, 0.0
      %430 = vadd.xlane.f32.xlu0 %v429
      %v431 = vpop.xlane.xlu0 %430
      %v432 = vadd.f32 %v415, %v422
      %v433 = vadd.f32 %v416, %v425
      %v434 = vadd.f32 %v417, %v428
      %v435 = vadd.f32 %v418, %v431
      %vm436 = vcmask 7168
      %437 = vst.msk [vmem:[%s268] sm:$0xff] %vm436, %v432
      %438 = vst.msk [vmem:[%s268 + $0x8] sm:$0xff] %vm436, %v433
      %439 = vst.msk [vmem:[%s268 + $0x10] sm:$0xff] %vm436, %v434
      %440 = vst.msk [vmem:[%s268 + $0x18] sm:$0xff] %vm436, %v435
      %v441 = vld [vmem:[%s273] sm:$0xff]
      %v442 = vld [vmem:[%s273 + $0x8] sm:$0xff]
      %v443 = vld [vmem:[%s273 + $0x10] sm:$0xff]
      %v444 = vld [vmem:[%s273 + $0x18] sm:$0xff]
      %v445 = vmul.f32 %v384, %v384
      %v446 = vmul.f32 %v389, %v389
      %v447 = vmul.f32 %v394, %v394
      %v448 = vmul.f32 %v399, %v399
      %v449 = vsel %vm419, %v445, 0.0
      %450 = vadd.xlane.f32.xlu0 %v449
      %v451 = vpop.xlane.xlu0 %450
      %v452 = vsel %vm419, %v446, 0.0
      %453 = vadd.xlane.f32.xlu0 %v452
      %v454 = vpop.xlane.xlu0 %453
      %v455 = vsel %vm419, %v447, 0.0
      %456 = vadd.xlane.f32.xlu0 %v455
      %v457 = vpop.xlane.xlu0 %456
      %v458 = vsel %vm419, %v448, 0.0
      %459 = vadd.xlane.f32.xlu0 %v458
      %v460 = vpop.xlane.xlu0 %459
      %v461 = vadd.f32 %v441, %v451
      %v462 = vadd.f32 %v442, %v454
      %v463 = vadd.f32 %v443, %v457
      %v464 = vadd.f32 %v444, %v460
      %465 = vst.msk [vmem:[%s273] sm:$0xff] %vm436, %v461
      %466 = vst.msk [vmem:[%s273 + $0x8] sm:$0xff] %vm436, %v462
      %467 = vst.msk [vmem:[%s273 + $0x10] sm:$0xff] %vm436, %v463
      %468 = vst.msk [vmem:[%s273 + $0x18] sm:$0xff] %vm436, %v464
      %p469 = scmp.lt.s32.totalorder %s20, 1
      %s470 = scalar_select %p469, %s20, 1
      %s471 = smul.addr %s470, 4
      %s472 = smul.addr %s471, 8
      %s473 = scalar_lea.vmem %s3, %s472
      %p474 = scmp.lt.s32.totalorder %s20, 1
      %s475 = scalar_select %p474, %s20, 1
      %s476 = smul.addr %s475, 4
      %s477 = smul.addr %s476, 8
      %s478 = scalar_lea.vmem %s4, %s477
      // Predicated region
      $region37: #{tpu_custom_call.1} parent=31 // pred_check
        %p479 = pneg %p126
      $region38: #{tpu_custom_call.1} parent=31 // pred_check_branch
        %481 = sbr.rel (%p479) target = $region40
      $region39: #{tpu_custom_call.1} parent=31 // pred_region
        _
      $region40: #{tpu_custom_call.1} parent=31 // pred_fallthru
        _
      // Predicated region
      $region41: #{tpu_custom_call.1} parent=31 // pred_check
        %p482 = pneg %p152
      $region42: #{tpu_custom_call.1} parent=31 // pred_check_branch
        %484 = sbr.rel (%p482) target = $region44
      $region43: #{tpu_custom_call.1} parent=31 // pred_region
        _
      $region44: #{tpu_custom_call.1} parent=31 // pred_fallthru
        _
    $region32: #{tpu_custom_call.1} parent=5 // pred_fallthru
      _
    %p485 = scmp.le.s32.totalorder 2, %s11
    // Predicated region
    $region45: #{tpu_custom_call.1} parent=5 // pred_check
      %p486 = pneg %p485
    $region46: #{tpu_custom_call.1} parent=5 // pred_check_branch
      %488 = sbr.rel (%p486) target = $region48
    $region47: #{tpu_custom_call.1} parent=5 // pred_region
      %s489 = ssub.s32 %s11, 2
      // Predicated region
      $region49: #{tpu_custom_call.1} parent=47 // pred_check
        %p490 = pneg %p132
      $region50: #{tpu_custom_call.1} parent=47 // pred_check_branch
        %492 = sbr.rel (%p490) target = $region52
      $region51: #{tpu_custom_call.1} parent=47 // pred_region
        %p493 = scmp.lt.s32.totalorder %s22, 1
        %s494 = scalar_select %p493, %s22, 1
        %s495 = smul.addr %s494, 4
        %s496 = smul.addr %s495, 8
        %s497 = scalar_lea.vmem %s3, %s496
      $region52: #{tpu_custom_call.1} parent=47 // pred_fallthru
        _
      // Predicated region
      $region53: #{tpu_custom_call.1} parent=47 // pred_check
        %p498 = pneg %p158
      $region54: #{tpu_custom_call.1} parent=47 // pred_check_branch
        %500 = sbr.rel (%p498) target = $region56
      $region55: #{tpu_custom_call.1} parent=47 // pred_region
        %p501 = scmp.lt.s32.totalorder %s22, 1
        %s502 = scalar_select %p501, %s22, 1
        %s503 = smul.addr %s502, 4
        %s504 = smul.addr %s503, 8
        %s505 = scalar_lea.vmem %s4, %s504
      $region56: #{tpu_custom_call.1} parent=47 // pred_fallthru
        _
    $region48: #{tpu_custom_call.1} parent=5 // pred_fallthru
      _
  $region6: #{tpu_custom_call.1} parent=0 // loop_footer
    %s15 = sadd.s32 1, %s11
  $region7: #{tpu_custom_call.1} parent=0 // loop_footer_branch
    %10 = sbr.rel target = $region3
  $region8: #{tpu_custom_call.1} parent=0 // loop_exit
    _

</llo_original>
